<compile_context>
chip_gen: v5e
topology: v5e:2x2
jax: 0.10.0
libtpu: 0.0.40
codegen_flags: <defaults>
</compile_context>

<pallas_src>
import functools
import math

import jax
import jax.numpy as jnp
from jax.experimental import pallas as pl
from jax.experimental.pallas import tpu as pltpu


_LANE = 128
_SUBLANE = 8


def _round_up(x, m):
    return ((x + m - 1) // m) * m


def _pick_tile(dim_p, cap, align):
    """Largest multiple of `align` that divides dim_p and is <= cap.

    dim_p is already a multiple of `align`, so this always terminates (worst
    case at `align` itself)."""
    t = min(cap, dim_p)
    t = max((t // align) * align, align)
    while dim_p % t:
        t -= align
    return t


def _num_tensorcores():
    # Best-effort: v7x has 2 TensorCores per chip, earlier generations have 1.
    try:
        kind = (getattr(jax.devices()[0], "device_kind", "") or "").lower()
        if "v7" in kind or "7x" in kind:
            return 2
    except Exception:
        pass
    return 1


def _noisy_linear_kernel(x_ref, wmu_ref, wsig_ref, ein_ref, vec_ref, o_ref,
                         *scratch, mxu_dtype):
    # scratch holds an f32 accumulator only when the output dtype is not f32;
    # otherwise we accumulate directly into the output block, which stays
    # resident across the k (reduction) axis since its block index is (i, j).
    acc_ref = scratch[0] if scratch else o_ref
    k = pl.program_id(2)

    @pl.when(k == 0)
    def _init():
        acc_ref[...] = jnp.zeros_like(acc_ref)

    eps_out = vec_ref[0:1, :]                                   # (1, tn)
    # Fused noisy weight tile already in (in, out) / MXU orientation.  The
    # factorized noise is rebuilt on the VPU: (tk,1) * (1,tn) -> (tk,tn), so
    # the dense weight_epsilon matrix is never streamed from HBM.
    w = wmu_ref[...] + wsig_ref[...] * (ein_ref[...] * eps_out)

    xv = x_ref[...]
    if mxu_dtype is not None:
        # Reduced-precision MXU operands, f32 accumulation.
        xv = xv.astype(mxu_dtype)
        w = w.astype(mxu_dtype)

    acc_ref[...] += jnp.dot(xv, w, preferred_element_type=jnp.float32)

    @pl.when(k == pl.num_programs(2) - 1)
    def _finalize():
        bias = vec_ref[1:2, :] + vec_ref[2:3, :] * vec_ref[0:1, :]   # (1, tn)
        o_ref[...] = (acc_ref[...] + bias).astype(o_ref.dtype)


def prepare_noisy_linear(weight_mu_t, weight_sigma_t, eps_in, eps_out,
                         bias_mu, bias_sigma):
    """One-time padding of parameters + noise to lane/sublane-aligned shapes.

    Run this at init / after reset_noise(), NOT per forward, so the hot path
    never re-pads the two full K x N weight matrices in HBM.

    Layout: weights are stored as (in_features, out_features) -- the transpose
    of PyTorch's (out, in) -- so the fused noisy weight is already in MXU
    orientation and the output is lane-dense along out_features.
    """
    K, N = weight_mu_t.shape
    Kp = _round_up(K, _LANE)
    Np = _round_up(N, _LANE)

    def pad2(a, r, c):
        a = a.astype(jnp.float32)
        if a.shape == (r, c):
            return a
        return jnp.pad(a, ((0, r - a.shape[0]), (0, c - a.shape[1])))

    wmu_p = pad2(weight_mu_t, Kp, Np)
    wsig_p = pad2(weight_sigma_t, Kp, Np)
    ein_p = pad2(eps_in.reshape(K, 1), Kp, 1)

    # Merge eps_out / bias_mu / bias_sigma into one (8, Np) slab -> single
    # small DMA stream instead of three.
    vec_p = jnp.zeros((_SUBLANE, Np), jnp.float32)
    vec_p = vec_p.at[0, :N].set(eps_out.astype(jnp.float32))
    vec_p = vec_p.at[1, :N].set(bias_mu.astype(jnp.float32))
    vec_p = vec_p.at[2, :N].set(bias_sigma.astype(jnp.float32))

    return dict(wmu=wmu_p, wsig=wsig_p, ein=ein_p, vec=vec_p,
                in_features=K, out_features=N)


def noisy_linear(x, prepared, *, tm_cap=512, tn_cap=512, tk_cap=1024,
                 mxu_dtype=None, num_parallel_cores=None):
    """NoisyLinear forward.  `prepared` comes from prepare_noisy_linear()."""
    K = prepared["in_features"]
    N = prepared["out_features"]
    wmu, wsig, ein, vec = (prepared["wmu"], prepared["wsig"],
                           prepared["ein"], prepared["vec"])
    Kp, Np = wmu.shape

    M = x.shape[0]
    assert x.shape[1] == K, "in_features mismatch"

    Mp = _round_up(M, _SUBLANE)
    tm = _pick_tile(Mp, tm_cap, _SUBLANE)
    tn = _pick_tile(Np, tn_cap, _LANE)
    tk = _pick_tile(Kp, tk_cap, _LANE)

    # Megacore (v7x): ensure the (i, j) "parallel" sub-grid has at least one
    # block per TensorCore, otherwise half the chip idles on small shapes.
    cores = _num_tensorcores() if num_parallel_cores is None else num_parallel_cores
    if cores > 1 and (Mp // tm) * (Np // tn) < cores and Np // _LANE >= cores:
        tn = _pick_tile(Np, max(Np // cores, _LANE), _LANE)

    # Only x is padded per call; all weight/noise padding was hoisted into
    # prepare_noisy_linear().  Zero padding is matmul-neutral.
    xp = x if x.shape == (Mp, Kp) else jnp.pad(x, ((0, Mp - M), (0, Kp - K)))

    out_dtype = x.dtype
    use_scratch = jnp.dtype(out_dtype) != jnp.dtype(jnp.float32)

    grid = (Mp // tm, Np // tn, Kp // tk)

    # Explicit VMEM budget: one double-buffered set of all streams, x2 margin,
    # clamped to stay well under v7x's 64 MiB physical VMEM.
    x_item = jnp.dtype(x.dtype).itemsize
    o_item = jnp.dtype(out_dtype).itemsize
    per_set = (tm * tk * x_item            # x
               + 2 * tk * tn * 4           # weight_mu + weight_sigma
               + tk * _LANE * 4            # eps_in (lane-padded in VMEM)
               + _SUBLANE * tn * 4         # merged eps_out/bias slab
               + tm * tn * o_item)         # output block
    if use_scratch:
        per_set += tm * tn * 4
    vmem_limit = int(min(max(4 * per_set, 32 << 20), 56 << 20))

    out = pl.pallas_call(
        functools.partial(_noisy_linear_kernel, mxu_dtype=mxu_dtype),
        out_shape=jax.ShapeDtypeStruct((Mp, Np), out_dtype),
        grid=grid,
        in_specs=[
            pl.BlockSpec((tm, tk), lambda i, j, k: (i, k)),        # x
            pl.BlockSpec((tk, tn), lambda i, j, k: (k, j)),        # weight_mu (in,out)
            pl.BlockSpec((tk, tn), lambda i, j, k: (k, j)),        # weight_sigma
            pl.BlockSpec((tk, 1), lambda i, j, k: (k, 0)),         # eps_in (in,1)
            pl.BlockSpec((_SUBLANE, tn), lambda i, j, k: (0, j)),  # [eps_out;b_mu;b_sig]
        ],
        out_specs=pl.BlockSpec((tm, tn), lambda i, j, k: (i, j)),
        scratch_shapes=([pltpu.VMEM((tm, tn), jnp.float32)]
                        if use_scratch else []),
        compiler_params=pltpu.CompilerParams(
            dimension_semantics=("parallel", "parallel", "arbitrary"),
            vmem_limit_bytes=vmem_limit),
    )(xp, wmu, wsig, ein, vec)

    if (Mp, Np) != (M, N):
        out = out[:M, :N]
    return out


def scale_noise(key, size):
    # PyTorch: x = randn(size); x.sign() * x.abs().sqrt()
    x = jax.random.normal(key, (size,), dtype=jnp.float32)
    return jnp.sign(x) * jnp.sqrt(jnp.abs(x))


def init_noisy_linear_params(key, in_features, out_features, std_init=0.5):
    """Matches PyTorch NoisyLinear init, but stores weights in (in, out)
    layout (transpose of PyTorch's (out, in)) and keeps the factorized noise
    as vectors instead of the dense weight_epsilon buffer."""
    k_wmu, k_bmu, k_ein, k_eout = jax.random.split(key, 4)
    mu_range = 1.0 / math.sqrt(in_features)

    weight_mu = jax.random.uniform(
        k_wmu, (out_features, in_features), minval=-mu_range, maxval=mu_range,
        dtype=jnp.float32)
    weight_sigma = jnp.full((out_features, in_features),
                            std_init / math.sqrt(in_features), jnp.float32)
    bias_mu = jax.random.uniform(
        k_bmu, (out_features,), minval=-mu_range, maxval=mu_range,
        dtype=jnp.float32)
    bias_sigma = jnp.full((out_features,),
                          std_init / math.sqrt(out_features), jnp.float32)

    eps_in = scale_noise(k_ein, in_features)      # epsilon_in
    eps_out = scale_noise(k_eout, out_features)   # epsilon_out == bias_epsilon

    return (weight_mu.T, weight_sigma.T, eps_in, eps_out, bias_mu, bias_sigma)


def reference(x, weight_mu_t, weight_sigma_t, eps_in, eps_out, bias_mu, bias_sigma):
    # PyTorch: W = weight_mu + weight_sigma * outer(eps_out, eps_in)  (out, in)
    #          y = x @ W.T + bias_mu + bias_sigma * eps_out
    w_t = weight_mu_t + weight_sigma_t * jnp.outer(eps_in, eps_out)   # == W.T
    b = bias_mu + bias_sigma * eps_out
    return x @ w_t + b


if __name__ == "__main__":
    key = jax.random.PRNGKey(0)
    k_p1, k_x1, k_p2, k_x2 = jax.random.split(key, 4)

    # 1) Small shape (toy module usage): single grid point, lane padding only
    #    (16 -> 128, 32 -> 128).
    batch, in_features, out_features = 8, 32, 16
    params = init_noisy_linear_params(k_p1, in_features, out_features)
    prepared = prepare_noisy_linear(*params)
    x = jax.random.normal(k_x1, (batch, in_features), dtype=jnp.float32)

    y = jax.block_until_ready(noisy_linear(x, prepared))
    y_ref = reference(x, *params)
    assert y.shape == (batch, out_features)
    assert jnp.allclose(y, y_ref, atol=1e-5, rtol=1e-5), "mismatch (small)"

    # 2) Shape exercising the k-reduction accumulator and the tight
    #    128-multiple padding (1200 -> 1280 = 2 x 640 k-steps, 300 -> 384).
    b2, in2, out2 = 16, 1200, 300
    params2 = init_noisy_linear_params(k_p2, in2, out2)
    prepared2 = prepare_noisy_linear(*params2)
    x2 = jax.random.normal(k_x2, (b2, in2), dtype=jnp.float32)

    y2 = jax.block_until_ready(noisy_linear(x2, prepared2))
    y2_ref = reference(x2, *params2)
    assert y2.shape == (b2, out2)
    assert jnp.allclose(y2, y2_ref, atol=1e-4, rtol=1e-4), "mismatch (tiled)"

    # 3) bf16-operand MXU fast path (f32 accumulate) -- looser tolerance.
    y3 = jax.block_until_ready(
        noisy_linear(x2, prepared2, mxu_dtype=jnp.bfloat16))
    rel = jnp.max(jnp.abs(y3 - y2_ref)) / (jnp.max(jnp.abs(y2_ref)) + 1e-6)
    assert rel < 5e-2, f"mismatch (bf16 fast path), rel={rel}"

    print("KERNEL_OK")
</pallas_src>

<mosaic_0001>
module attributes {stable_mosaic.version = 11 : i64} {
  func.func @_noisy_linear_kernel(%arg0: i32, %arg1: i32, %arg2: i32, %arg3: memref<8x128xf32, #tpu.memory_space<vmem>>, %arg4: memref<128x128xf32, #tpu.memory_space<vmem>>, %arg5: memref<128x128xf32, #tpu.memory_space<vmem>>, %arg6: memref<128x1xf32, #tpu.memory_space<vmem>>, %arg7: memref<8x128xf32, #tpu.memory_space<vmem>>, %arg8: memref<8x128xf32, #tpu.memory_space<vmem>>) attributes {dimension_semantics = [#tpu.dimension_semantics<parallel>, #tpu.dimension_semantics<parallel>, #tpu.dimension_semantics<arbitrary>], iteration_bounds = array<i64: 1, 1, 1>, scalar_prefetch = 0 : i64, scratch_operands = 0 : i64, tpu.core_type = #tpu.core_type<tc>, window_params = [{transform_indices = @transform_0, window_bounds = array<i64: 8, 128>}, {transform_indices = @transform_1, window_bounds = array<i64: 128, 128>}, {transform_indices = @transform_2, window_bounds = array<i64: 128, 128>}, {transform_indices = @transform_3, window_bounds = array<i64: 128, 1>}, {transform_indices = @transform_4, window_bounds = array<i64: 8, 128>}, {transform_indices = @transform_5, window_bounds = array<i64: 8, 128>}]} {
    %c0_i32 = arith.constant 0 : i32
    %0 = arith.cmpi eq, %arg2, %c0_i32 : i32
    %1 = arith.extui %0 : i1 to i32
    %c0_i32_0 = arith.constant 0 : i32
    %2 = arith.cmpi ne, %1, %c0_i32_0 : i32
    scf.if %2 {
      %cst_16 = arith.constant 0.000000e+00 : f32
      %20 = vector.broadcast %cst_16 : f32 to vector<8x128xf32>
      %c0_17 = arith.constant 0 : index
      %c0_18 = arith.constant 0 : index
      %21 = vector.load %arg8[%c0_17, %c0_18] : memref<8x128xf32, #tpu.memory_space<vmem>>, vector<8x128xf32>
      tpu.vector_store %arg8[%c0_17, %c0_18], %20 {strides = array<i32>} : memref<8x128xf32, #tpu.memory_space<vmem>>, vector<8x128xf32>,
    } else {
    }
    %c0 = arith.constant 0 : index
    %c0_1 = arith.constant 0 : index
    %3 = vector.load %arg7[%c0, %c0_1] : memref<8x128xf32, #tpu.memory_space<vmem>>, vector<1x128xf32>
    %c0_2 = arith.constant 0 : index
    %c0_3 = arith.constant 0 : index
    %4 = vector.load %arg4[%c0_2, %c0_3] : memref<128x128xf32, #tpu.memory_space<vmem>>, vector<128x128xf32>
    %c0_4 = arith.constant 0 : index
    %c0_5 = arith.constant 0 : index
    %5 = vector.load %arg5[%c0_4, %c0_5] : memref<128x128xf32, #tpu.memory_space<vmem>>, vector<128x128xf32>
    %c0_6 = arith.constant 0 : index
    %c0_7 = arith.constant 0 : index
    %6 = vector.load %arg6[%c0_6, %c0_7] : memref<128x1xf32, #tpu.memory_space<vmem>>, vector<128x1xf32>
    %7 = vector.broadcast %6 : vector<128x1xf32> to vector<128x128xf32>
    %8 = vector.broadcast %3 : vector<1x128xf32> to vector<128x128xf32>
    %9 = arith.mulf %7, %8 : vector<128x128xf32>
    %10 = arith.mulf %5, %9 : vector<128x128xf32>
    %11 = arith.addf %4, %10 : vector<128x128xf32>
    %c0_8 = arith.constant 0 : index
    %c0_9 = arith.constant 0 : index
    %12 = vector.load %arg3[%c0_8, %c0_9] : memref<8x128xf32, #tpu.memory_space<vmem>>, vector<8x128xf32>
    %c0_10 = arith.constant 0 : index
    %c0_11 = arith.constant 0 : index
    %13 = vector.load %arg8[%c0_10, %c0_11] : memref<8x128xf32, #tpu.memory_space<vmem>>, vector<8x128xf32>
    %cst = arith.constant dense<0.000000e+00> : vector<8x128xf32>
    %14 = tpu.matmul %12, %11, %cst {dimension_numbers = #tpu.dot_dimension_numbers<[1], [0], [0], [1], [0, 0, 1, 1], [], []>} : vector<8x128xf32>, vector<128x128xf32>, vector<8x128xf32> -> vector<8x128xf32>
    %15 = arith.addf %13, %14 : vector<8x128xf32>
    %c0_12 = arith.constant 0 : index
    %c0_13 = arith.constant 0 : index
    %16 = vector.load %arg8[%c0_12, %c0_13] : memref<8x128xf32, #tpu.memory_space<vmem>>, vector<8x128xf32>
    tpu.vector_store %arg8[%c0_12, %c0_13], %15 {strides = array<i32>} : memref<8x128xf32, #tpu.memory_space<vmem>>, vector<8x128xf32>,
    %c0_i32_14 = arith.constant 0 : i32
    %17 = arith.cmpi eq, %arg2, %c0_i32_14 : i32
    %18 = arith.extui %17 : i1 to i32
    %c0_i32_15 = arith.constant 0 : i32
    %19 = arith.cmpi ne, %18, %c0_i32_15 : i32
    scf.if %19 {
      %c1 = arith.constant 1 : index
      %c0_16 = arith.constant 0 : index
      %20 = vector.load %arg7[%c1, %c0_16] : memref<8x128xf32, #tpu.memory_space<vmem>>, vector<1x128xf32>
      %c2 = arith.constant 2 : index
      %c0_17 = arith.constant 0 : index
      %21 = vector.load %arg7[%c2, %c0_17] : memref<8x128xf32, #tpu.memory_space<vmem>>, vector<1x128xf32>
      %c0_18 = arith.constant 0 : index
      %c0_19 = arith.constant 0 : index
      %22 = vector.load %arg7[%c0_18, %c0_19] : memref<8x128xf32, #tpu.memory_space<vmem>>, vector<1x128xf32>
      %23 = arith.mulf %21, %22 : vector<1x128xf32>
      %24 = arith.addf %20, %23 : vector<1x128xf32>
      %c0_20 = arith.constant 0 : index
      %c0_21 = arith.constant 0 : index
      %25 = vector.load %arg8[%c0_20, %c0_21] : memref<8x128xf32, #tpu.memory_space<vmem>>, vector<8x128xf32>
      %26 = vector.broadcast %24 : vector<1x128xf32> to vector<8x128xf32>
      %27 = arith.addf %25, %26 : vector<8x128xf32>
      %c0_22 = arith.constant 0 : index
      %c0_23 = arith.constant 0 : index
      %28 = vector.load %arg8[%c0_22, %c0_23] : memref<8x128xf32, #tpu.memory_space<vmem>>, vector<8x128xf32>
      tpu.vector_store %arg8[%c0_22, %c0_23], %27 {strides = array<i32>} : memref<8x128xf32, #tpu.memory_space<vmem>>, vector<8x128xf32>,
    } else {
    }
    return
  }
  func.func @transform_0(%arg0: i32, %arg1: i32, %arg2: i32) -> (i32, i32) {
    %c0_i32 = arith.constant 0 : i32
    return %arg0, %arg2 : i32, i32
  }
  func.func @transform_1(%arg0: i32, %arg1: i32, %arg2: i32) -> (i32, i32) {
    %c0_i32 = arith.constant 0 : i32
    return %arg2, %arg1 : i32, i32
  }
  func.func @transform_2(%arg0: i32, %arg1: i32, %arg2: i32) -> (i32, i32) {
    %c0_i32 = arith.constant 0 : i32
    return %arg2, %arg1 : i32, i32
  }
  func.func @transform_3(%arg0: i32, %arg1: i32, %arg2: i32) -> (i32, i32) {
    %c0_i32 = arith.constant 0 : i32
    %c0_i32_0 = arith.constant 0 : i32
    return %arg2, %c0_i32 : i32, i32
  }
  func.func @transform_4(%arg0: i32, %arg1: i32, %arg2: i32) -> (i32, i32) {
    %c0_i32 = arith.constant 0 : i32
    %c0_i32_0 = arith.constant 0 : i32
    return %c0_i32, %arg1 : i32, i32
  }
  func.func @transform_5(%arg0: i32, %arg1: i32, %arg2: i32) -> (i32, i32) {
    %c0_i32 = arith.constant 0 : i32
    return %arg0, %arg1 : i32, i32
  }
}

</mosaic_0001>

<llo_original>
// kernel: tpu_custom_call.1
$region0: #{tpu_custom_call.1}
  #allocation0 [shape = 'u32[]', space=smem, size = 0x4, offset = 0x4, fixed_abs, tag = 'smem constant byte address 0x4 - core index']
  #allocation1 [shape = 'u32[72,128]{1,0:T(1,128)}', space=vmem, size = 0x9000, scoped, tag = 'internal scratch']
  %s0 = inlined_call_operand.hbm [shape: f32[8,128], index: 0, kind: input, shape index: {}]
  %s1 = inlined_call_operand.vmem [shape: f32[128,128], index: 1, kind: input, shape index: {}]
  %s2 = inlined_call_operand.hbm [shape: f32[128,128], index: 2, kind: input, shape index: {}]
  %s3 = inlined_call_operand.vmem [shape: f32[128,1], index: 3, kind: input, shape index: {}]
  %s4 = inlined_call_operand.hbm [shape: f32[8,128], index: 4, kind: input, shape index: {}]
  %s5 = inlined_call_operand.hbm [shape: f32[8,128], index: 5, kind: output, shape index: {}]
  %s6 = sld [smem:[#allocation0]]
  $region50: #{tpu_custom_call.1} parent=0
    _
  %s8 = ssub.s32 1, %s6
  %s9 = scalar_select 0, %s8, %s6
  $region1: #{tpu_custom_call.1} parent=0
    #allocation2 [shape = 'u8[4096]{0}', space=vmem, size = 0x1000, scoped, tag = 'input window, operand 0, single buffered']
    #allocation3 [shape = 's32[1]{0}', space=sflag, size = 0x4, scoped, tag = 'scoped memory for tpu_custom_call.1']
    #allocation4 [shape = 's32[1]{0}', space=sflag, size = 0x4, scoped, tag = 'scoped memory for tpu_custom_call.1']
    #allocation5 [shape = 'u8[65536]{0}', space=vmem, size = 0x10000, scoped, tag = 'input window, operand 2, single buffered']
    #allocation6 [shape = 's32[1]{0}', space=sflag, size = 0x4, scoped, tag = 'scoped memory for tpu_custom_call.1']
    #allocation7 [shape = 'u8[4096]{0}', space=vmem, size = 0x1000, scoped, tag = 'input window, operand 4, single buffered']
    #allocation8 [shape = 'u8[4096]{0}', space=vmem, size = 0x1000, scoped, tag = 'output window, operand 0, single buffered']
    %10 = vsyncpa [#allocation3], 0
    %11 = vsyncpa [#allocation6], 0
    %12 = vsyncpa [#allocation4], 0
    // Predicated region
    $region2: #{tpu_custom_call.1} parent=1 // pred_check
      _
    $region3: #{tpu_custom_call.1} parent=1 // pred_check_branch
      %14 = sbr.rel (0) target = $region5
    $region4: #{tpu_custom_call.1} parent=1 // pred_region
      %16 = vsyncadd [#allocation3], 0
      %s18 = sshll.u32 %s0, 4
      %s19 = int_to_ptr.hbm [resolvable:$true] %s18
      %s20 = sshll.u32 [#allocation2], 4
      %s21 = int_to_ptr.vmem [resolvable:$true] %s20
      %23 = dma.hbm_to_vmem [thread:$0]  %s19, 128, %s21, [#allocation3]
    $region5: #{tpu_custom_call.1} parent=1 // pred_fallthru
      _
    // Predicated region
    $region6: #{tpu_custom_call.1} parent=1 // pred_check
      _
    $region7: #{tpu_custom_call.1} parent=1 // pred_check_branch
      %25 = sbr.rel (0) target = $region9
    $region8: #{tpu_custom_call.1} parent=1 // pred_region
      _
    $region9: #{tpu_custom_call.1} parent=1 // pred_fallthru
      _
    // Predicated region
    $region10: #{tpu_custom_call.1} parent=1 // pred_check
      _
    $region11: #{tpu_custom_call.1} parent=1 // pred_check_branch
      %27 = sbr.rel (0) target = $region13
    $region12: #{tpu_custom_call.1} parent=1 // pred_region
      %29 = vsyncadd [#allocation6], 0
      %s30 = sshll.u32 %s2, 4
      %s31 = int_to_ptr.hbm [resolvable:$true] %s30
      %s32 = sshll.u32 [#allocation5], 4
      %s33 = int_to_ptr.vmem [resolvable:$true] %s32
      %38 = dma.hbm_to_vmem [thread:$0]  %s31, 2048, %s33, [#allocation6], 128, 128, 8
    $region13: #{tpu_custom_call.1} parent=1 // pred_fallthru
      _
    // Predicated region
    $region14: #{tpu_custom_call.1} parent=1 // pred_check
      _
    $region15: #{tpu_custom_call.1} parent=1 // pred_check_branch
      %40 = sbr.rel (0) target = $region17
    $region16: #{tpu_custom_call.1} parent=1 // pred_region
      _
    $region17: #{tpu_custom_call.1} parent=1 // pred_fallthru
      _
    // Predicated region
    $region18: #{tpu_custom_call.1} parent=1 // pred_check
      _
    $region19: #{tpu_custom_call.1} parent=1 // pred_check_branch
      %42 = sbr.rel (0) target = $region21
    $region20: #{tpu_custom_call.1} parent=1 // pred_region
      %44 = vsyncadd [#allocation6], 0
      %s46 = sshll.u32 %s4, 4
      %s47 = int_to_ptr.hbm [resolvable:$true] %s46
      %s48 = sshll.u32 [#allocation7], 4
      %s49 = int_to_ptr.vmem [resolvable:$true] %s48
      %51 = dma.hbm_to_vmem [thread:$0]  %s47, 128, %s49, [#allocation6]
    $region21: #{tpu_custom_call.1} parent=1 // pred_fallthru
      _
    // Predicated region
    $region22: #{tpu_custom_call.1} parent=1 // pred_check
      _
    $region23: #{tpu_custom_call.1} parent=1 // pred_check_branch
      %53 = sbr.rel (0) target = $region25
    $region24: #{tpu_custom_call.1} parent=1 // pred_region
      %55 = dma.done [#allocation3], 128
    $region25: #{tpu_custom_call.1} parent=1 // pred_fallthru
      _
    // Predicated region
    $region26: #{tpu_custom_call.1} parent=1 // pred_check
      _
    $region27: #{tpu_custom_call.1} parent=1 // pred_check_branch
      %57 = sbr.rel (0) target = $region29
    $region28: #{tpu_custom_call.1} parent=1 // pred_region
      %59 = dma.done [#allocation6], 2048
    $region29: #{tpu_custom_call.1} parent=1 // pred_fallthru
      _
    // Predicated region
    $region30: #{tpu_custom_call.1} parent=1 // pred_check
      _
    $region31: #{tpu_custom_call.1} parent=1 // pred_check_branch
      %61 = sbr.rel (0) target = $region33
    $region32: #{tpu_custom_call.1} parent=1 // pred_region
      %63 = dma.done [#allocation6], 128
    $region33: #{tpu_custom_call.1} parent=1 // pred_fallthru
      _
    %p64 = scmp.eq.s32.totalorder 0, 0
    // Predicated region
    $region34: #{tpu_custom_call.1} parent=1 // pred_check
      %p65 = pneg %p64
    $region35: #{tpu_custom_call.1} parent=1 // pred_check_branch
      %67 = sbr.rel (%p65) target = $region37
    $region36: #{tpu_custom_call.1} parent=1 // pred_region
      %68 = vst [vmem:[#allocation8] sm:$0xff] 0.0
    $region37: #{tpu_custom_call.1} parent=1 // pred_fallthru
      _
    %v69 = vld [vmem:[#allocation7] sm:$0x1]
    %v70 = vld [vmem:[%s1] sm:$0xff]
    %v71 = vld [vmem:[%s1 + $0x8] sm:$0xff]
    %v72 = vld [vmem:[%s1 + $0x10] sm:$0xff]
    %v73 = vld [vmem:[%s1 + $0x18] sm:$0xff]
    %v74 = vld [vmem:[%s1 + $0x20] sm:$0xff]
    %v75 = vld [vmem:[%s1 + $0x28] sm:$0xff]
    %v76 = vld [vmem:[%s1 + $0x30] sm:$0xff]
    %v77 = vld [vmem:[%s1 + $0x38] sm:$0xff]
    %v78 = vld [vmem:[%s1 + $0x40] sm:$0xff]
    %v79 = vld [vmem:[%s1 + $0x48] sm:$0xff]
    %v80 = vld [vmem:[%s1 + $0x50] sm:$0xff]
    %v81 = vld [vmem:[%s1 + $0x58] sm:$0xff]
    %v82 = vld [vmem:[%s1 + $0x60] sm:$0xff]
    %v83 = vld [vmem:[%s1 + $0x68] sm:$0xff]
    %v84 = vld [vmem:[%s1 + $0x70] sm:$0xff]
    %v85 = vld [vmem:[%s1 + $0x78] sm:$0xff]
    %v86 = vld [vmem:[#allocation5] sm:$0xff]
    %v87 = vld [vmem:[#allocation5 + $0x8] sm:$0xff]
    %v88 = vld [vmem:[#allocation5 + $0x10] sm:$0xff]
    %v89 = vld [vmem:[#allocation5 + $0x18] sm:$0xff]
    %v90 = vld [vmem:[#allocation5 + $0x20] sm:$0xff]
    %v91 = vld [vmem:[#allocation5 + $0x28] sm:$0xff]
    %v92 = vld [vmem:[#allocation5 + $0x30] sm:$0xff]
    %v93 = vld [vmem:[#allocation5 + $0x38] sm:$0xff]
    %v94 = vld [vmem:[#allocation5 + $0x40] sm:$0xff]
    %v95 = vld [vmem:[#allocation5 + $0x48] sm:$0xff]
    %v96 = vld [vmem:[#allocation5 + $0x50] sm:$0xff]
    %v97 = vld [vmem:[#allocation5 + $0x58] sm:$0xff]
    %v98 = vld [vmem:[#allocation5 + $0x60] sm:$0xff]
    %v99 = vld [vmem:[#allocation5 + $0x68] sm:$0xff]
    %v100 = vld [vmem:[#allocation5 + $0x70] sm:$0xff]
    %v101 = vld [vmem:[#allocation5 + $0x78] sm:$0xff]
    %v102 = vld [vmem:[%s3] sm:$0xff]
    %v103 = vld [vmem:[%s3 + $0x8] sm:$0xff]
    %v104 = vld [vmem:[%s3 + $0x10] sm:$0xff]
    %v105 = vld [vmem:[%s3 + $0x18] sm:$0xff]
    %v106 = vld [vmem:[%s3 + $0x20] sm:$0xff]
    %v107 = vld [vmem:[%s3 + $0x28] sm:$0xff]
    %v108 = vld [vmem:[%s3 + $0x30] sm:$0xff]
    %v109 = vld [vmem:[%s3 + $0x38] sm:$0xff]
    %v110 = vld [vmem:[%s3 + $0x40] sm:$0xff]
    %v111 = vld [vmem:[%s3 + $0x48] sm:$0xff]
    %v112 = vld [vmem:[%s3 + $0x50] sm:$0xff]
    %v113 = vld [vmem:[%s3 + $0x58] sm:$0xff]
    %v114 = vld [vmem:[%s3 + $0x60] sm:$0xff]
    %v115 = vld [vmem:[%s3 + $0x68] sm:$0xff]
    %v116 = vld [vmem:[%s3 + $0x70] sm:$0xff]
    %v117 = vld [vmem:[%s3 + $0x78] sm:$0xff]
    %119 = vset.pattern.permute.xlu0 0
    %120 = vperm.xlu0 %119, %v102
    %v121 = vpop.permute.xlu0 %120
    %124 = vset.pattern.permute.xlu0 0
    %125 = vperm.xlu0 %124, %v103
    %v126 = vpop.permute.xlu0 %125
    %129 = vset.pattern.permute.xlu0 0
    %130 = vperm.xlu0 %129, %v104
    %v131 = vpop.permute.xlu0 %130
    %134 = vset.pattern.permute.xlu0 0
    %135 = vperm.xlu0 %134, %v105
    %v136 = vpop.permute.xlu0 %135
    %139 = vset.pattern.permute.xlu0 0
    %140 = vperm.xlu0 %139, %v106
    %v141 = vpop.permute.xlu0 %140
    %144 = vset.pattern.permute.xlu0 0
    %145 = vperm.xlu0 %144, %v107
    %v146 = vpop.permute.xlu0 %145
    %149 = vset.pattern.permute.xlu0 0
    %150 = vperm.xlu0 %149, %v108
    %v151 = vpop.permute.xlu0 %150
    %154 = vset.pattern.permute.xlu0 0
    %155 = vperm.xlu0 %154, %v109
    %v156 = vpop.permute.xlu0 %155
    %159 = vset.pattern.permute.xlu0 0
    %160 = vperm.xlu0 %159, %v110
    %v161 = vpop.permute.xlu0 %160
    %164 = vset.pattern.permute.xlu0 0
    %165 = vperm.xlu0 %164, %v111
    %v166 = vpop.permute.xlu0 %165
    %169 = vset.pattern.permute.xlu0 0
    %170 = vperm.xlu0 %169, %v112
    %v171 = vpop.permute.xlu0 %170
    %174 = vset.pattern.permute.xlu0 0
    %175 = vperm.xlu0 %174, %v113
    %v176 = vpop.permute.xlu0 %175
    %179 = vset.pattern.permute.xlu0 0
    %180 = vperm.xlu0 %179, %v114
    %v181 = vpop.permute.xlu0 %180
    %184 = vset.pattern.permute.xlu0 0
    %185 = vperm.xlu0 %184, %v115
    %v186 = vpop.permute.xlu0 %185
    %189 = vset.pattern.permute.xlu0 0
    %190 = vperm.xlu0 %189, %v116
    %v191 = vpop.permute.xlu0 %190
    %194 = vset.pattern.permute.xlu0 0
    %195 = vperm.xlu0 %194, %v117
    %v196 = vpop.permute.xlu0 %195
    %v198 = vperm.slane %v69, 0
    %v199 = vmul.f32 %v121, %v198
    %v200 = vmul.f32 %v126, %v198
    %v201 = vmul.f32 %v131, %v198
    %v202 = vmul.f32 %v136, %v198
    %v203 = vmul.f32 %v141, %v198
    %v204 = vmul.f32 %v146, %v198
    %v205 = vmul.f32 %v151, %v198
    %v206 = vmul.f32 %v156, %v198
    %v207 = vmul.f32 %v161, %v198
    %v208 = vmul.f32 %v166, %v198
    %v209 = vmul.f32 %v171, %v198
    %v210 = vmul.f32 %v176, %v198
    %v211 = vmul.f32 %v181, %v198
    %v212 = vmul.f32 %v186, %v198
    %v213 = vmul.f32 %v191, %v198
    %v214 = vmul.f32 %v196, %v198
    %v215 = vmul.f32 %v86, %v199
    %v216 = vmul.f32 %v87, %v200
    %v217 = vmul.f32 %v88, %v201
    %v218 = vmul.f32 %v89, %v202
    %v219 = vmul.f32 %v90, %v203
    %v220 = vmul.f32 %v91, %v204
    %v221 = vmul.f32 %v92, %v205
    %v222 = vmul.f32 %v93, %v206
    %v223 = vmul.f32 %v94, %v207
    %v224 = vmul.f32 %v95, %v208
    %v225 = vmul.f32 %v96, %v209
    %v226 = vmul.f32 %v97, %v210
    %v227 = vmul.f32 %v98, %v211
    %v228 = vmul.f32 %v99, %v212
    %v229 = vmul.f32 %v100, %v213
    %v230 = vmul.f32 %v101, %v214
    %v231 = vadd.f32 %v70, %v215
    %v232 = vadd.f32 %v71, %v216
    %v233 = vadd.f32 %v72, %v217
    %v234 = vadd.f32 %v73, %v218
    %v235 = vadd.f32 %v74, %v219
    %v236 = vadd.f32 %v75, %v220
    %v237 = vadd.f32 %v76, %v221
    %v238 = vadd.f32 %v77, %v222
    %v239 = vadd.f32 %v78, %v223
    %v240 = vadd.f32 %v79, %v224
    %v241 = vadd.f32 %v80, %v225
    %v242 = vadd.f32 %v81, %v226
    %v243 = vadd.f32 %v82, %v227
    %v244 = vadd.f32 %v83, %v228
    %v245 = vadd.f32 %v84, %v229
    %v246 = vadd.f32 %v85, %v230
    %v247 = vld [vmem:[#allocation2] sm:$0xff]
    %v248 = vld [vmem:[#allocation8] sm:$0xff]
    %249 = vmatpush.msra.mxu0 %v246
    %250 = vmatpush.msra.mxu0 %v245
    %251 = vmatpush.msra.mxu0 %v244
    %252 = vmatpush.msra.mxu0 %v243
    %253 = vmatpush.msra.mxu0 %v242
    %254 = vmatpush.msra.mxu0 %v241
    %255 = vmatpush.msra.mxu0 %v240
    %256 = vmatpush.msra.mxu0 %v239
    %257 = vmatpush.msra.mxu0 %v238
    %258 = vmatpush.msra.mxu0 %v237
    %259 = vmatpush.msra.mxu0 %v236
    %260 = vmatpush.msra.mxu0 %v235
    %261 = vmatpush.msra.mxu0 %v234
    %262 = vmatpush.msra.mxu0 %v233
    %263 = vmatpush.msra.mxu0 %v232
    %264 = vmatpush.msra.mxu0 %v231
    %265 = vmatmul.f32.gmra.mxu0 %v247
    %v266 = vpop.f32.mrf.mxu0
    %v267 = vadd.f32 0.0, %v266
    %268 = vdwg.mxu0
    %v269 = vadd.f32 %v248, %v267
    %270 = vst [vmem:[#allocation8] sm:$0xff] %v269
    // Predicated region
    $region38: #{tpu_custom_call.1} parent=1 // pred_check
      %p271 = pneg %p64
    $region39: #{tpu_custom_call.1} parent=1 // pred_check_branch
      %273 = sbr.rel (%p271) target = $region41
    $region40: #{tpu_custom_call.1} parent=1 // pred_region
      %v274 = vld [vmem:[#allocation7 + $0x1] sm:$0x1]
      %v275 = vld [vmem:[#allocation7 + $0x2] sm:$0x1]
      %v276 = vld [vmem:[#allocation7] sm:$0x1]
      %v277 = vmul.f32 %v275, %v276
      %v278 = vadd.f32 %v274, %v277
      %v279 = vld [vmem:[#allocation8] sm:$0xff]
      %v280 = vperm.slane %v278, 0
      %v281 = vadd.f32 %v279, %v280
      %282 = vst [vmem:[#allocation8] sm:$0xff] %v281
    $region41: #{tpu_custom_call.1} parent=1 // pred_fallthru
      _
    // Predicated region
    $region42: #{tpu_custom_call.1} parent=1 // pred_check
      _
    $region43: #{tpu_custom_call.1} parent=1 // pred_check_branch
      %284 = sbr.rel (0) target = $region45
    $region44: #{tpu_custom_call.1} parent=1 // pred_region
      %286 = vsyncadd [#allocation4], 0
      %s288 = sshll.u32 [#allocation8], 4
      %s289 = int_to_ptr.vmem [resolvable:$true] %s288
      %s290 = sshll.u32 %s5, 4
      %s291 = int_to_ptr.hbm [resolvable:$true] %s290
      %293 = dma.vmem_to_hbm [thread:$0]  %s289, 128, %s291, [#allocation4]
    $region45: #{tpu_custom_call.1} parent=1 // pred_fallthru
      _
    // Predicated region
    $region46: #{tpu_custom_call.1} parent=1 // pred_check
      _
    $region47: #{tpu_custom_call.1} parent=1 // pred_check_branch
      %295 = sbr.rel (0) target = $region49
    $region48: #{tpu_custom_call.1} parent=1 // pred_region
      %297 = dma.done [#allocation4], 128
    $region49: #{tpu_custom_call.1} parent=1 // pred_fallthru
      _
    %298 = vsyncpa [#allocation3], 1
    %299 = vsyncpa [#allocation6], 1
    %300 = vsyncpa [#allocation4], 1

</llo_original>
